<compile_context>
chip_gen: v5e
topology: v5e:2x2
jax: 0.10.0
libtpu: 0.0.40
codegen_flags: <defaults>
</compile_context>

<pallas_src>
import functools

import jax
import jax.numpy as jnp
from jax.experimental import pallas as pl
from jax.experimental.pallas import tpu as pltpu


def _round_up(n, m):
    return ((n + m - 1) // m) * m


def _cdiv(a, b):
    return (a + b - 1) // b


# ---------------------------------------------------------------------------
# Tile / VMEM budgeting helpers (all trace-time Python ints)
# ---------------------------------------------------------------------------
def _linear_tile_and_vmem(B, F, x_itemsize, tb=None):
    align = 8
    if tb is None:
        # Roofline-driven: ~2 MiB x tile so the ~0.35 us/step grid overhead is
        # amortized (measured 29% -> 85% of HBM BW as tiles grow).
        tb = _round_up(max((2 << 20) // max(F * x_itemsize, 1), align), align)
        tb = min(tb, 16384)
    tb = max(_round_up(tb, align), align)
    # Keep the double-buffered x tile well inside VMEM (v7x-safe budget).
    while tb > align and 2 * tb * F * x_itemsize > (32 << 20):
        tb = max(_round_up(tb // 2, align), align)
    # Guarantee >=2 grid steps so the 'parallel' batch axis can shard across
    # v7x's two TensorCores.
    if B > 2 * align:
        tb = min(tb, _round_up(_cdiv(B, 2), align))
    tb = min(tb, _round_up(B, align))
    tb = max(tb, align)
    footprint = 2 * tb * F * x_itemsize + 2 * F * 4 + 2 * tb * 4
    vmem_limit = int(min(max(int(footprint * 1.5), 16 << 20), 60 << 20))
    return tb, vmem_limit


def _perceptron_tile_and_vmem(B, F, H1, H2, x_itemsize, tb=None):
    align = 8

    def footprint(t):
        x_tiles = 2 * t * F * x_itemsize                 # double-buffered x tile
        weights = 2 * (F * H1 * 2 + H1 * H2 * 2)         # bf16 W1/W2 (counted x2)
        biases = 2 * (H1 + 2 * H2) * 4
        inter = t * H1 * 4 + t * H1 * 2 + t * H2 * 4     # h1 f32 + h1 bf16 + h2 f32
        out_tiles = 2 * t * 4
        return x_tiles + weights + biases + inter + out_tiles

    if tb is None:
        # Multiple of 256 -> full MXU tiles on v6e/v7x; amortizes the per-step
        # overhead and the W1/W2 MXU weight pushes over more LHS rows.
        tb = 512
    tb = max(_round_up(tb, align), align)
    # Shrink until the whole working set leaves headroom under v7x's 64 MiB.
    while tb > 64 and footprint(tb) > (40 << 20):
        tb = max(_round_up(tb // 2, align), align)
    if B > 2 * align:
        tb = min(tb, _round_up(_cdiv(B, 2), align))      # >=2 steps for v7x megacore
    tb = min(tb, _round_up(B, align))
    tb = max(tb, align)
    vmem_limit = int(min(max(int(footprint(tb) * 1.3), 16 << 20), 60 << 20))
    return tb, vmem_limit


# ---------------------------------------------------------------------------
# Pallas kernels
# ---------------------------------------------------------------------------
def _linear_logreg_kernel(x_ref, w_ref, b_ref, o_ref):
    # sigmoid(x @ w + b) with out_features == 1.
    # N=1 matmul would waste the MXU; VPU multiply + lane reduction instead.
    # Explicit f32 upcast before the mul (v5e VPU has no bf16; cast hides under DMA).
    x = x_ref[...].astype(jnp.float32)
    z = jnp.sum(x * w_ref[...], axis=-1, keepdims=True) + b_ref[0, 0]
    o_ref[...] = jax.nn.sigmoid(z)


def _perceptron_logreg_kernel(x_ref, w1_ref, b1_ref, w2_ref, b2_ref,
                              w3_ref, b3_ref, o_ref):
    # sigmoid(ReLU(ReLU(x @ W1 + b1) @ W2 + b2) @ w3 + b3)
    # bf16 MXU operands, f32 accumulation; bias/ReLU/sigmoid in f32.
    x = x_ref[...].astype(jnp.bfloat16)
    h1 = jnp.dot(x, w1_ref[...], preferred_element_type=jnp.float32)
    h1 = jnp.maximum(h1 + b1_ref[...], 0.0)
    h2 = jnp.dot(h1.astype(jnp.bfloat16), w2_ref[...],
                 preferred_element_type=jnp.float32)
    h2 = jnp.maximum(h2 + b2_ref[...], 0.0)
    # Final 512 -> 1 layer: N=1, keep it off the MXU (VPU mul + XLU reduce).
    z = jnp.sum(h2 * w3_ref[...], axis=-1, keepdims=True) + b3_ref[0, 0]
    o_ref[...] = jax.nn.sigmoid(z)


# ---------------------------------------------------------------------------
# Wrappers
# ---------------------------------------------------------------------------
@functools.partial(jax.jit, static_argnames=("tb",))
def logistic_regression_linear(x, w, b, *, tb=None):
    """kernel='linear': sigmoid(x @ w + b).  x: [B, F], w: [F, 1], b: [1, 1] -> [B, 1]."""
    B, F = x.shape
    TB, vmem_limit = _linear_tile_and_vmem(B, F, x.dtype.itemsize, tb)
    w_row = w.reshape(1, F).astype(jnp.float32)

    return pl.pallas_call(
        _linear_logreg_kernel,
        out_shape=jax.ShapeDtypeStruct((B, 1), jnp.float32),
        grid=(_cdiv(B, TB),),
        in_specs=[
            pl.BlockSpec((TB, F), lambda i: (i, 0)),             # x tile: pipelined over batch
            pl.BlockSpec((1, F), lambda i: (0, 0)),              # w row: VMEM-resident
            pl.BlockSpec(memory_space=pltpu.MemorySpace.SMEM),   # (1,1) bias as SMEM scalar
        ],
        out_specs=pl.BlockSpec((TB, 1), lambda i: (i, 0)),
        compiler_params=pltpu.CompilerParams(
            dimension_semantics=("parallel",),
            vmem_limit_bytes=vmem_limit),
    )(x, w_row, b.astype(jnp.float32))


@functools.partial(jax.jit, static_argnames=("tb",))
def logistic_regression_perceptron(x, w1, b1, w2, b2, w3, b3, *, tb=None):
    """kernel='perceptron': F -> 1024 -> ReLU -> 512 -> ReLU -> 1 -> sigmoid."""
    B, F = x.shape
    H1 = w1.shape[1]          # 1024
    H2 = w2.shape[1]          # 512
    TB, vmem_limit = _perceptron_tile_and_vmem(B, F, H1, H2, x.dtype.itemsize, tb)

    return pl.pallas_call(
        _perceptron_logreg_kernel,
        out_shape=jax.ShapeDtypeStruct((B, 1), jnp.float32),
        grid=(_cdiv(B, TB),),
        in_specs=[
            pl.BlockSpec((TB, F), lambda i: (i, 0)),             # x tile: pipelined over batch
            pl.BlockSpec((F, H1), lambda i: (0, 0)),             # W1 (bf16): resident
            pl.BlockSpec((1, H1), lambda i: (0, 0)),             # b1 (f32): resident
            pl.BlockSpec((H1, H2), lambda i: (0, 0)),            # W2 (bf16): resident
            pl.BlockSpec((1, H2), lambda i: (0, 0)),             # b2 (f32): resident
            pl.BlockSpec((1, H2), lambda i: (0, 0)),             # w3 row (f32): resident
            pl.BlockSpec(memory_space=pltpu.MemorySpace.SMEM),   # (1,1) b3 as SMEM scalar
        ],
        out_specs=pl.BlockSpec((TB, 1), lambda i: (i, 0)),
        compiler_params=pltpu.CompilerParams(
            dimension_semantics=("parallel",),
            vmem_limit_bytes=vmem_limit),
    )(x, w1.astype(jnp.bfloat16), b1.astype(jnp.float32),
      w2.astype(jnp.bfloat16), b2.astype(jnp.float32),
      w3.reshape(1, H2).astype(jnp.float32), b3.astype(jnp.float32))


# ---------------------------------------------------------------------------
# Deterministic parameter init (mimics torch.nn.Linear uniform(-1/sqrt(in), 1/sqrt(in)))
# ---------------------------------------------------------------------------
def _init_linear(key, fan_in, fan_out):
    kw, kb = jax.random.split(key)
    bound = 1.0 / jnp.sqrt(jnp.float32(fan_in))
    w = jax.random.uniform(kw, (fan_in, fan_out), jnp.float32, -bound, bound)
    b = jax.random.uniform(kb, (1, fan_out), jnp.float32, -bound, bound)
    return w, b


# ---------------------------------------------------------------------------
# Reference (plain JAX, f32) for correctness check
# ---------------------------------------------------------------------------
def _ref_linear(x, w, b):
    return jax.nn.sigmoid(x @ w + b)


def _ref_perceptron(x, w1, b1, w2, b2, w3, b3):
    h1 = jnp.maximum(x @ w1 + b1, 0.0)
    h2 = jnp.maximum(h1 @ w2 + b2, 0.0)
    return jax.nn.sigmoid(h2 @ w3 + b3)


# TODO(synk): fit()/metrics_tab() (Adam training loop, BCELoss, thresholding) are
# host-side training utilities, not part of the forward pass; not implemented here.

if __name__ == "__main__":
    key = jax.random.PRNGKey(0)
    k_x, k1, k2, k3, k4 = jax.random.split(key, 5)

    B, F = 64, 32                 # small demo batch / n_features
    x = jax.random.normal(k_x, (B, F), jnp.float32)

    # --- kernel='linear' -----------------------------------------------------
    w_lin, b_lin = _init_linear(k1, F, 1)
    out_lin = logistic_regression_linear(x, w_lin, b_lin)   # auto-tiled (2-step grid here)
    jax.block_until_ready(out_lin)
    ref_lin = _ref_linear(x, w_lin, b_lin)
    assert out_lin.shape == (B, 1)
    assert jnp.allclose(out_lin, ref_lin, atol=1e-5, rtol=1e-5)

    # --- kernel='perceptron' (Linear(F,1024)->ReLU->Linear(1024,512)->ReLU->Linear(512,1)) ---
    w1, b1 = _init_linear(k2, F, 1024)
    w2, b2 = _init_linear(k3, 1024, 512)
    w3, b3 = _init_linear(k4, 512, 1)
    out_mlp = logistic_regression_perceptron(x, w1, b1, w2, b2, w3, b3)
    jax.block_until_ready(out_mlp)
    ref_mlp = _ref_perceptron(x, w1, b1, w2, b2, w3, b3)
    assert out_mlp.shape == (B, 1)
    # bf16 matmul operands vs. f32 reference -> loosened tolerance
    assert jnp.allclose(out_mlp, ref_mlp, atol=2e-2, rtol=2e-2)

    print("KERNEL_OK")
</pallas_src>

<mosaic_0001>
module attributes {stable_mosaic.version = 11 : i64} {
  func.func @_linear_logreg_kernel(%arg0: i32, %arg1: memref<32x32xf32, #tpu.memory_space<vmem>>, %arg2: memref<1x32xf32, #tpu.memory_space<vmem>>, %arg3: memref<1x1xf32, #tpu.memory_space<smem>>, %arg4: memref<32x1xf32, #tpu.memory_space<vmem>>) attributes {dimension_semantics = [#tpu.dimension_semantics<parallel>], iteration_bounds = array<i64: 2>, scalar_prefetch = 0 : i64, scratch_operands = 0 : i64, tpu.core_type = #tpu.core_type<tc>, window_params = [{transform_indices = @transform_0, window_bounds = array<i64: 32, 32>}, {pipeline_mode = #tpu.pipeline_mode<synchronous>, transform_indices = @transform_1, window_bounds = array<i64: 1, 32>}, {transform_indices = @transform_2, window_bounds = array<i64: 1, 1>}, {transform_indices = @transform_3, window_bounds = array<i64: 32, 1>}]} {
    %c0 = arith.constant 0 : index
    %c0_0 = arith.constant 0 : index
    %0 = vector.load %arg1[%c0, %c0_0] : memref<32x32xf32, #tpu.memory_space<vmem>>, vector<32x32xf32>
    %c0_1 = arith.constant 0 : index
    %c0_2 = arith.constant 0 : index
    %1 = vector.load %arg2[%c0_1, %c0_2] : memref<1x32xf32, #tpu.memory_space<vmem>>, vector<1x32xf32>
    %2 = vector.broadcast %1 : vector<1x32xf32> to vector<32x32xf32>
    %3 = arith.mulf %0, %2 : vector<32x32xf32>
    %cst = arith.constant dense<0.000000e+00> : vector<32xf32>
    %4 = vector.multi_reduction <add>, %3, %cst [1] : vector<32x32xf32> to vector<32xf32>
    %5 = vector.shape_cast %4 : vector<32xf32> to vector<32x1xf32>
    %c0_3 = arith.constant 0 : index
    %c0_4 = arith.constant 0 : index
    %6 = memref.load %arg3[%c0_3, %c0_4] : memref<1x1xf32, #tpu.memory_space<smem>>
    %7 = vector.broadcast %6 : f32 to vector<32x1xf32>
    %8 = arith.addf %5, %7 : vector<32x1xf32>
    %9 = arith.negf %8 : vector<32x1xf32>
    %10 = math.exp %9 : vector<32x1xf32>
    %cst_5 = arith.constant 1.000000e+00 : f32
    %11 = vector.broadcast %cst_5 : f32 to vector<32x1xf32>
    %12 = arith.addf %11, %10 : vector<32x1xf32>
    %13 = arith.divf %11, %12 : vector<32x1xf32>
    %c0_6 = arith.constant 0 : index
    %c0_7 = arith.constant 0 : index
    %14 = vector.load %arg4[%c0_6, %c0_7] : memref<32x1xf32, #tpu.memory_space<vmem>>, vector<32x1xf32>
    tpu.vector_store %arg4[%c0_6, %c0_7], %13 {strides = array<i32>} : memref<32x1xf32, #tpu.memory_space<vmem>>, vector<32x1xf32>,
    return
  }
  func.func @transform_0(%arg0: i32) -> (i32, i32) {
    %c0_i32 = arith.constant 0 : i32
    %c0_i32_0 = arith.constant 0 : i32
    return %arg0, %c0_i32 : i32, i32
  }
  func.func @transform_1(%arg0: i32) -> (i32, i32) {
    %c0_i32 = arith.constant 0 : i32
    %c0_i32_0 = arith.constant 0 : i32
    %c0_i32_1 = arith.constant 0 : i32
    return %c0_i32, %c0_i32_0 : i32, i32
  }
  func.func @transform_2(%arg0: i32) -> (i32, i32) {
    %c0_i32 = arith.constant 0 : i32
    %c0_i32_0 = arith.constant 0 : i32
    %c0_i32_1 = arith.constant 0 : i32
    return %c0_i32, %c0_i32_0 : i32, i32
  }
  func.func @transform_3(%arg0: i32) -> (i32, i32) {
    %c0_i32 = arith.constant 0 : i32
    %c0_i32_0 = arith.constant 0 : i32
    return %arg0, %c0_i32 : i32, i32
  }
}

</mosaic_0001>

<llo_original>
// kernel: logistic_regression_linear.1
$region0: #{logistic_regression_linear.1}
  #allocation0 [shape = 'u32[]', space=smem, size = 0x4, offset = 0x4, fixed_abs, tag = 'smem constant byte address 0x4 - core index']
  #allocation1 [shape = 'u32[72,128]{1,0:T(1,128)}', space=vmem, size = 0x9000, scoped, tag = 'internal scratch']
  #allocation2 [shape = 'f32[1,1]{1,0:T(1,128)S(6)}', space=smem, size = 0x200, scoped, tag = 'scoped memory for logistic_regression_linear.1']
  %s0 = inlined_call_operand.vmem [shape: f32[64,32], index: 0, kind: input, shape index: {}]
  %s1 = inlined_call_operand.vmem [shape: f32[1,32], index: 1, kind: input, shape index: {}]
  %s2 = inlined_call_operand.<no memory space> [shape: f32[1,1], index: 2, kind: input, shape index: {}]
  %s3 = inlined_call_operand.vmem [shape: f32[64,1], index: 3, kind: output, shape index: {}]
  %s4 = sld [smem:[#allocation0]]
  $region45: #{logistic_regression_linear.1} parent=0
    _
  %s6 = ssub.s32 1, %s4
  %s7 = scalar_select 0, %s6, %s4
  %8 = sst [smem:[#allocation2]] %s2
  loop: start=0, step=1, limit=4
  $region2: #{logistic_regression_linear.1} parent=0 // loop_pre_header
    _
  $region3: #{logistic_regression_linear.1} parent=0 // loop_header
    %s10 = sphi 0, %s14
    %p11 = scmp.ge.s32.totalorder %s10, 4
    %s20 = sphi 0, %s22
    %s23 = sphi 0, %s20
    %s24 = sphi 0, %s23
    %s40 = sphi 0, %s24
    %s44 = sphi 0, %s44
    %s46 = sphi 0, %s44
    %s47 = sphi 0, %s46
    %s61 = sphi 0, %s47
    %s65 = sphi 0, %s65
    %s67 = sphi 0, %s65
    %s68 = sphi 0, %s67
    %s82 = sphi 0, %s68
    %s88 = sphi 0, %s90
    %s91 = sphi 0, %s88
    %s92 = sphi 0, %s91
    %s108 = sphi 0, %s92
  $region4: #{logistic_regression_linear.1} parent=0 // loop_header_branch
    %13 = sbr.rel (%p11) target = $region8
  $region5: #{logistic_regression_linear.1} parent=0 // loop_body
    %s15 = ssub.s32 %s10, 1
    %s16 = ssub.s32 %s10, 2
    %s17 = sadd.s32 %s10, 1
    %s18 = ssub.s32 %s10, %s17
    %p19 = scmp.eq.s32.totalorder %s18, 0
    %s21 = sadd.s32 %s20, 1
    %s22 = scalar_select %p19, %s20, %s21
    %p25 = pneg %p19
    %p26 = scmp.eq.s32.totalorder %s10, 1
    %p27 = por %p25, %p26
    %p28 = scmp.ne.s32.totalorder %s20, %s23
    %p29 = scmp.eq.s32.totalorder %s10, 0
    %p30 = por %p28, %p29
    %p31 = scmp.ne.s32.totalorder %s20, %s23
    %p32 = scmp.eq.s32.totalorder %s15, 1
    %p33 = por %p31, %p32
    %p34 = scmp.ne.s32.totalorder %s23, %s24
    %p35 = scmp.eq.s32.totalorder %s15, 0
    %p36 = por %p34, %p35
    %p37 = scmp.ne.s32.totalorder %s23, %s24
    %p38 = scmp.eq.s32.totalorder %s16, 1
    %p39 = por %p37, %p38
    %p41 = scmp.ne.s32.totalorder %s24, %s40
    %p42 = scmp.eq.s32.totalorder %s16, 0
    %p43 = por %p41, %p42
    %s45 = sadd.s32 %s44, 1
    %p48 = scmp.eq.s32.totalorder %s10, 1
    %p49 = scmp.ne.s32.totalorder %s44, %s46
    %p50 = scmp.eq.s32.totalorder %s10, 0
    %p51 = por %p49, %p50
    %p52 = scmp.ne.s32.totalorder %s44, %s46
    %p53 = scmp.eq.s32.totalorder %s15, 1
    %p54 = por %p52, %p53
    %p55 = scmp.ne.s32.totalorder %s46, %s47
    %p56 = scmp.eq.s32.totalorder %s15, 0
    %p57 = por %p55, %p56
    %p58 = scmp.ne.s32.totalorder %s46, %s47
    %p59 = scmp.eq.s32.totalorder %s16, 1
    %p60 = por %p58, %p59
    %p62 = scmp.ne.s32.totalorder %s47, %s61
    %p63 = scmp.eq.s32.totalorder %s16, 0
    %p64 = por %p62, %p63
    %s66 = sadd.s32 %s65, 1
    %p69 = scmp.eq.s32.totalorder %s10, 1
    %p70 = scmp.ne.s32.totalorder %s65, %s67
    %p71 = scmp.eq.s32.totalorder %s10, 0
    %p72 = por %p70, %p71
    %p73 = scmp.ne.s32.totalorder %s65, %s67
    %p74 = scmp.eq.s32.totalorder %s15, 1
    %p75 = por %p73, %p74
    %p76 = scmp.ne.s32.totalorder %s67, %s68
    %p77 = scmp.eq.s32.totalorder %s15, 0
    %p78 = por %p76, %p77
    %p79 = scmp.ne.s32.totalorder %s67, %s68
    %p80 = scmp.eq.s32.totalorder %s16, 1
    %p81 = por %p79, %p80
    %p83 = scmp.ne.s32.totalorder %s68, %s82
    %p84 = scmp.eq.s32.totalorder %s16, 0
    %p85 = por %p83, %p84
    %s86 = ssub.s32 %s10, %s17
    %p87 = scmp.eq.s32.totalorder %s86, 0
    %s89 = sadd.s32 %s88, 1
    %s90 = scalar_select %p87, %s88, %s89
    %p93 = pneg %p87
    %p94 = scmp.eq.s32.totalorder %s10, 1
    %p95 = por %p93, %p94
    %p96 = scmp.ne.s32.totalorder %s88, %s91
    %p97 = scmp.eq.s32.totalorder %s10, 0
    %p98 = por %p96, %p97
    %p99 = scmp.ne.s32.totalorder %s88, %s91
    %p100 = scmp.eq.s32.totalorder %s15, 1
    %p101 = por %p99, %p100
    %p102 = scmp.ne.s32.totalorder %s91, %s92
    %p103 = scmp.eq.s32.totalorder %s15, 0
    %p104 = por %p102, %p103
    %p105 = scmp.ne.s32.totalorder %s91, %s92
    %p106 = scmp.eq.s32.totalorder %s16, 1
    %p107 = por %p105, %p106
    %p109 = scmp.ne.s32.totalorder %s92, %s108
    %p110 = scmp.eq.s32.totalorder %s16, 0
    %p111 = por %p109, %p110
    %p112 = scmp.le.s32.totalorder 1, %s10
    %p113 = scmp.lt.s32.totalorder %s10, 3
    %p114 = pnand %p112, %p113
    %p115 = pneg %p114
    // Predicated region
    $region9: #{logistic_regression_linear.1} parent=5 // pred_check
      _
    $region10: #{logistic_regression_linear.1} parent=5 // pred_check_branch
      %117 = sbr.rel (%p114) target = $region12
    $region11: #{logistic_regression_linear.1} parent=5 // pred_region
      %s118 = ssub.s32 %s10, 1
      // Predicated region
      $region13: #{logistic_regression_linear.1} parent=11 // pred_check
        %p119 = pneg %p57
      $region14: #{logistic_regression_linear.1} parent=11 // pred_check_branch
        %121 = sbr.rel (%p119) target = $region16
      $region15: #{logistic_regression_linear.1} parent=11 // pred_region
        _
      $region16: #{logistic_regression_linear.1} parent=11 // pred_fallthru
        _
      // Predicated region
      $region17: #{logistic_regression_linear.1} parent=11 // pred_check
        %p122 = pneg %p78
      $region18: #{logistic_regression_linear.1} parent=11 // pred_check_branch
        %124 = sbr.rel (%p122) target = $region20
      $region19: #{logistic_regression_linear.1} parent=11 // pred_region
        _
      $region20: #{logistic_regression_linear.1} parent=11 // pred_fallthru
        _
    $region12: #{logistic_regression_linear.1} parent=5 // pred_fallthru
      _
    %p125 = scmp.lt.s32.totalorder %s10, 2
    // Predicated region
    $region21: #{logistic_regression_linear.1} parent=5 // pred_check
      %p126 = pneg %p125
    $region22: #{logistic_regression_linear.1} parent=5 // pred_check_branch
      %128 = sbr.rel (%p126) target = $region24
    $region23: #{logistic_regression_linear.1} parent=5 // pred_region
      // Predicated region
      $region25: #{logistic_regression_linear.1} parent=23 // pred_check
        %p129 = pneg %p30
      $region26: #{logistic_regression_linear.1} parent=23 // pred_check_branch
        %131 = sbr.rel (%p129) target = $region28
      $region27: #{logistic_regression_linear.1} parent=23 // pred_region
        %s132 = smul.u32 4, %s10
        %p133 = scmp.lt.s32.totalorder %s132, 7
        %s134 = scalar_select %p133, %s132, 7
        %s135 = smul.addr %s134, 8
        %s136 = scalar_lea.vmem %s0, %s135
        %s137 = smul.u32 4, %s10
      $region28: #{logistic_regression_linear.1} parent=23 // pred_fallthru
        _
    $region24: #{logistic_regression_linear.1} parent=5 // pred_fallthru
      _
    %p138 = scmp.le.s32.totalorder 1, %s10
    %p139 = scmp.lt.s32.totalorder %s10, 3
    %p140 = pnand %p138, %p139
    %p141 = pneg %p140
    // Predicated region
    $region29: #{logistic_regression_linear.1} parent=5 // pred_check
      _
    $region30: #{logistic_regression_linear.1} parent=5 // pred_check_branch
      %143 = sbr.rel (%p140) target = $region32
    $region31: #{logistic_regression_linear.1} parent=5 // pred_region
      %s144 = ssub.s32 %s10, 1
      %s145 = smul.u32 4, %s15
      %p146 = scmp.lt.s32.totalorder %s145, 7
      %s147 = scalar_select %p146, %s145, 7
      %s148 = smul.addr %s147, 8
      %s149 = scalar_lea.vmem %s0, %s148
      %p150 = pneg %p36
      %p151 = pneg %p33
      %p152 = pneg %p57
      %p153 = pneg %p54
      %p154 = pneg %p78
      %p155 = pneg %p75
      %p156 = pneg %p104
      %p157 = pneg %p101
      %s158 = smul.u32 4, %s15
      %p159 = scmp.lt.s32.totalorder %s158, 7
      %s160 = scalar_select %p159, %s158, 7
      %s161 = smul.addr %s160, 8
      %s162 = scalar_lea.vmem %s3, %s161
      %s163 = smul.u32 4, %s15
      %p164 = scmp.lt.s32.totalorder %s163, 7
      %s165 = scalar_select %p164, %s163, 7
      %s166 = smul.addr %s165, 8
      %s167 = scalar_lea.vmem %s0, %s166
      %s168 = smul.u32 4, %s15
      %s169 = smul.u32 4, %s15
      %p170 = scmp.lt.s32.totalorder %s169, 7
      %s171 = scalar_select %p170, %s169, 7
      %s172 = smul.addr %s171, 8
      %s173 = scalar_lea.vmem %s3, %s172
      %s174 = smul.u32 4, %s15
      %v175 = vld [vmem:[%s167] sm:$0xff]
      %v176 = vld [vmem:[%s167 + $0x8] sm:$0xff]
      %v177 = vld [vmem:[%s167 + $0x10] sm:$0xff]
      %v178 = vld [vmem:[%s167 + $0x18] sm:$0xff]
      %v179 = vld [vmem:[%s1] sm:$0x1]
      %v181 = vperm.slane %v179, 0
      %v183 = vmul.f32 %v175, %v181
      %v184 = vmul.f32 %v176, %v181
      %v185 = vmul.f32 %v177, %v181
      %v186 = vmul.f32 %v178, %v181
      %vm187 = vcmask 261120
      %v188 = vsel %vm187, %v183, 0.0
      %189 = vadd.xlane.f32.xlu0 %v188
      %v190 = vpop.xlane.xlu0 %189
      %v191 = vsel %vm187, %v184, 0.0
      %192 = vadd.xlane.f32.xlu0 %v191
      %v193 = vpop.xlane.xlu0 %192
      %v194 = vsel %vm187, %v185, 0.0
      %195 = vadd.xlane.f32.xlu0 %v194
      %v196 = vpop.xlane.xlu0 %195
      %v197 = vsel %vm187, %v186, 0.0
      %198 = vadd.xlane.f32.xlu0 %v197
      %v199 = vpop.xlane.xlu0 %198
      %s200 = sld [smem:[#allocation2]]
      %v201 = vstv %s200
      %v202 = vadd.f32 %v190, %v201
      %v203 = vadd.f32 %v193, %v201
      %v204 = vadd.f32 %v196, %v201
      %v205 = vadd.f32 %v199, %v201
      %v206 = vxor.u32 %v202, 2147483648
      %v207 = vxor.u32 %v203, 2147483648
      %v208 = vxor.u32 %v204, 2147483648
      %v209 = vxor.u32 %v205, 2147483648
      %v210 = vmul.f32 %v206, 1.442695
      %v211 = vpow.pop %v210
      %v212 = vmul.f32 %v207, 1.442695
      %v213 = vpow.pop %v212
      %v214 = vmul.f32 %v208, 1.442695
      %v215 = vpow.pop %v214
      %v216 = vmul.f32 %v209, 1.442695
      %v217 = vpow.pop %v216
      %v218 = vadd.f32 %v211, 1.0
      %v219 = vadd.f32 %v213, 1.0
      %v220 = vadd.f32 %v215, 1.0
      %v221 = vadd.f32 %v217, 1.0
      %v222 = vrcp.pop %v218
      %v223 = vmul.f32 %v218, %v222
      %v224 = vsub.f32 1.0, %v223
      %v225 = vmul.f32 %v222, %v224
      %v226 = vadd.f32 %v222, %v225
      %vm227 = vweird.f32 %v218
      %vm228 = vweird.f32 %v222
      %vm229 = vmor %vm227, %vm228
      %v230 = vsel %vm229, %v222, %v226
      %v231 = vand.u32 2147483647, %v218
      %vm232 = vcmp.eq.f32.partialorder %v231, 8.507059e+37
      %v233 = vand.u32 %v218, 2147483648
      %v234 = vor.u32 1.1754944e-38, %v233
      %v235 = vsel %vm232, %v234, %v230
      %v236 = vmul.f32 1.0, %v235
      %v237 = vrcp.pop %v219
      %v238 = vmul.f32 %v219, %v237
      %v239 = vsub.f32 1.0, %v238
      %v240 = vmul.f32 %v237, %v239
      %v241 = vadd.f32 %v237, %v240
      %vm242 = vweird.f32 %v219
      %vm243 = vweird.f32 %v237
      %vm244 = vmor %vm242, %vm243
      %v245 = vsel %vm244, %v237, %v241
      %v246 = vand.u32 2147483647, %v219
      %vm247 = vcmp.eq.f32.partialorder %v246, 8.507059e+37
      %v248 = vand.u32 %v219, 2147483648
      %v249 = vor.u32 1.1754944e-38, %v248
      %v250 = vsel %vm247, %v249, %v245
      %v251 = vmul.f32 1.0, %v250
      %v252 = vrcp.pop %v220
      %v253 = vmul.f32 %v220, %v252
      %v254 = vsub.f32 1.0, %v253
      %v255 = vmul.f32 %v252, %v254
      %v256 = vadd.f32 %v252, %v255
      %vm257 = vweird.f32 %v220
      %vm258 = vweird.f32 %v252
      %vm259 = vmor %vm257, %vm258
      %v260 = vsel %vm259, %v252, %v256
      %v261 = vand.u32 2147483647, %v220
      %vm262 = vcmp.eq.f32.partialorder %v261, 8.507059e+37
      %v263 = vand.u32 %v220, 2147483648
      %v264 = vor.u32 1.1754944e-38, %v263
      %v265 = vsel %vm262, %v264, %v260
      %v266 = vmul.f32 1.0, %v265
      %v267 = vrcp.pop %v221
      %v268 = vmul.f32 %v221, %v267
      %v269 = vsub.f32 1.0, %v268
      %v270 = vmul.f32 %v267, %v269
      %v271 = vadd.f32 %v267, %v270
      %vm272 = vweird.f32 %v221
      %vm273 = vweird.f32 %v267
      %vm274 = vmor %vm272, %vm273
      %v275 = vsel %vm274, %v267, %v271
      %v276 = vand.u32 2147483647, %v221
      %vm277 = vcmp.eq.f32.partialorder %v276, 8.507059e+37
      %v278 = vand.u32 %v221, 2147483648
      %v279 = vor.u32 1.1754944e-38, %v278
      %v280 = vsel %vm277, %v279, %v275
      %v281 = vmul.f32 1.0, %v280
      %vm282 = vcmask 7168
      %283 = vst.msk [vmem:[%s173] sm:$0xff] %vm282, %v236
      %284 = vst.msk [vmem:[%s173 + $0x8] sm:$0xff] %vm282, %v251
      %285 = vst.msk [vmem:[%s173 + $0x10] sm:$0xff] %vm282, %v266
      %286 = vst.msk [vmem:[%s173 + $0x18] sm:$0xff] %vm282, %v281
      %s287 = smul.u32 4, %s15
      %p288 = scmp.lt.s32.totalorder %s287, 7
      %s289 = scalar_select %p288, %s287, 7
      %s290 = smul.addr %s289, 8
      %s291 = scalar_lea.vmem %s3, %s290
      // Predicated region
      $region33: #{logistic_regression_linear.1} parent=31 // pred_check
        %p292 = pneg %p101
      $region34: #{logistic_regression_linear.1} parent=31 // pred_check_branch
        %294 = sbr.rel (%p292) target = $region36
      $region35: #{logistic_regression_linear.1} parent=31 // pred_region
        %s295 = smul.u32 4, %s15
      $region36: #{logistic_regression_linear.1} parent=31 // pred_fallthru
        _
    $region32: #{logistic_regression_linear.1} parent=5 // pred_fallthru
      _
    %p296 = scmp.le.s32.totalorder 2, %s10
    // Predicated region
    $region37: #{logistic_regression_linear.1} parent=5 // pred_check
      %p297 = pneg %p296
    $region38: #{logistic_regression_linear.1} parent=5 // pred_check_branch
      %299 = sbr.rel (%p297) target = $region40
    $region39: #{logistic_regression_linear.1} parent=5 // pred_region
      %s300 = ssub.s32 %s10, 2
      // Predicated region
      $region41: #{logistic_regression_linear.1} parent=39 // pred_check
        %p301 = pneg %p107
      $region42: #{logistic_regression_linear.1} parent=39 // pred_check_branch
        %303 = sbr.rel (%p301) target = $region44
      $region43: #{logistic_regression_linear.1} parent=39 // pred_region
        %s304 = smul.u32 4, %s16
        %p305 = scmp.lt.s32.totalorder %s304, 7
        %s306 = scalar_select %p305, %s304, 7
        %s307 = smul.addr %s306, 8
        %s308 = scalar_lea.vmem %s3, %s307
      $region44: #{logistic_regression_linear.1} parent=39 // pred_fallthru
        _
    $region40: #{logistic_regression_linear.1} parent=5 // pred_fallthru
      _
  $region6: #{logistic_regression_linear.1} parent=0 // loop_footer
    %s14 = sadd.s32 1, %s10
  $region7: #{logistic_regression_linear.1} parent=0 // loop_footer_branch
    %9 = sbr.rel target = $region3
  $region8: #{logistic_regression_linear.1} parent=0 // loop_exit
    _

</llo_original>
